<compile_context>
chip_gen: v7x
topology: tpu7x:2x2x1
jax: 0.10.0
libtpu: 0.0.40
codegen_flags: <defaults>
</compile_context>

<pallas_src>
import functools

import jax
import jax.numpy as jnp
import numpy as np
from jax.experimental import pallas as pl
from jax.experimental.pallas import tpu as pltpu


# ----------------------------------------------------------------------------
# Pallas kernels
# ----------------------------------------------------------------------------
def _conv3x3s2_kernel(xa_ref, xb_ref, w_ref, b_ref, o_ref, *, th, wo, c):
    """3x3 stride-2 conv (after right/bottom zero pad) on one (batch, row-tile).

    Pair-split layout: xr[n, hp, a, wp, b*c + ci] == x_pad[n, 2*hp+a, 2*wp+b, ci].

    xa_ref: (1, th, 2, wo+1, 2*c)   pair-rows [th*i, th*i + th)
    xb_ref: (1, 1,  2, wo+1, 2*c)   pair-row  th*(i+1)  (halo for kh=2 taps)
    w_ref : (9*c, co)               rows ordered (kh, kw, ci)
    b_ref : (1, co)
    o_ref : (1, th, wo, co)
    """
    xa = xa_ref[...]
    xb = xb_ref[...]
    w = w_ref[...]
    bias = b_ref[...].astype(jnp.float32)            # (1, co), hoisted
    co = bias.shape[-1]

    # Padded-input row blocks for the three kh taps, each (th, wo+1, 2c).
    rows0 = xa[0, :, 0]                              # rows 2*(th*i + t)
    rows1 = xa[0, :, 1]                              # rows 2*(th*i + t) + 1
    if th > 1:                                       # rows 2*(th*i + t) + 2
        rows2 = jnp.concatenate([xa[0, 1:, 0], xb[0, :, 0]], axis=0)
    else:
        rows2 = xb[0, :, 0]

    acc = jnp.zeros((th * wo, co), jnp.float32)
    for kh, rowsk in enumerate((rows0, rows1, rows2)):
        k0 = 3 * c * kh
        # kw = 0,1 taps: padded cols (2w, 2w+1) == lanes [0, 2c) of pair w.
        left = rowsk[:, 0:wo, :].reshape(th * wo, 2 * c)
        acc = acc + jnp.dot(left, w[k0:k0 + 2 * c, :],
                            preferred_element_type=jnp.float32)
        # kw = 2 tap: padded col 2w+2 == pair (w+1), phase 0 == lanes [0, c).
        right = rowsk[:, 1:wo + 1, 0:c].reshape(th * wo, c)
        acc = acc + jnp.dot(right, w[k0 + 2 * c:k0 + 3 * c, :],
                            preferred_element_type=jnp.float32)

    o_ref[0] = (acc + bias).reshape(th, wo, co).astype(o_ref.dtype)


def _avgpool2x2_kernel(x_ref, o_ref, *, c):
    """2x2 stride-2 average pool on one (batch, row-tile) block.

    x_ref: (1, th, 2, wo, 2*c)   pair-split input
    o_ref: (1, th, wo, c)
    """
    x = x_ref[...]
    p00 = x[0, :, 0, :, 0:c].astype(jnp.float32)
    p01 = x[0, :, 0, :, c:2 * c].astype(jnp.float32)
    p10 = x[0, :, 1, :, 0:c].astype(jnp.float32)
    p11 = x[0, :, 1, :, c:2 * c].astype(jnp.float32)
    o_ref[0] = ((p00 + p01 + p10 + p11) * 0.25).astype(o_ref.dtype)


# ----------------------------------------------------------------------------
# Wrapper
# ----------------------------------------------------------------------------
def _pick_row_tile(ho, wo, target_rows=256):
    """Largest divisor th of ho with th*wo <= ~target MXU rows (VMEM friendly)."""
    best = 1
    for t in range(1, ho + 1):
        if ho % t == 0 and t * wo <= max(target_rows, wo):
            best = t
    return best


@functools.partial(jax.jit, static_argnames=("with_conv",))
def downsample(x_nchw, conv_w, conv_b, *, with_conv=True):
    """Forward pass of Downsample.  x_nchw: (N, C, H, W); returns NCHW."""
    x = jnp.transpose(x_nchw, (0, 2, 3, 1))            # NHWC, channels on lanes
    n, h, w, c = x.shape
    params = pltpu.CompilerParams(dimension_semantics=("parallel", "parallel"))

    if with_conv:
        ho = (h - 2) // 2 + 1                           # pad bottom by 1, k=3, s=2
        wo = (w - 2) // 2 + 1
        co = conv_b.shape[0]

        # Zero pad right/bottom: covers the torch (0,1,0,1) pad; any extra
        # row/col added to make the pair split even is never read by a tap.
        xp = jnp.pad(x, ((0, 0), (0, 2 * ho + 2 - h), (0, 2 * wo + 2 - w), (0, 0)))
        # Free row-major reshape -> (n, ho+1, 2, wo+1, 2c)
        xr = xp.reshape(n, ho + 1, 2, wo + 1, 2 * c)

        # torch weight (co, ci, kh, kw) -> (kh, kw, ci, co) -> (9c, co)
        w_mat = jnp.transpose(conv_w, (2, 3, 1, 0)).reshape(9 * c, co)
        b_mat = conv_b.reshape(1, co)

        th = _pick_row_tile(ho, wo)
        kern = functools.partial(_conv3x3s2_kernel, th=th, wo=wo, c=c)

        out = pl.pallas_call(
            kern,
            out_shape=jax.ShapeDtypeStruct((n, ho, wo, co), x.dtype),
            grid=(n, ho // th),
            in_specs=[
                pl.BlockSpec((1, th, 2, wo + 1, 2 * c),
                             lambda b, i: (b, i, 0, 0, 0)),
                pl.BlockSpec((1, 1, 2, wo + 1, 2 * c),
                             lambda b, i: (b, th * (i + 1), 0, 0, 0)),
                pl.BlockSpec((9 * c, co), lambda b, i: (0, 0)),
                pl.BlockSpec((1, co), lambda b, i: (0, 0)),
            ],
            out_specs=pl.BlockSpec((1, th, wo, co), lambda b, i: (b, i, 0, 0)),
            compiler_params=params,
            cost_estimate=pl.CostEstimate(
                flops=2 * n * ho * wo * 9 * c * co,
                transcendentals=0,
                bytes_accessed=(xr.size + w_mat.size + b_mat.size
                                + n * ho * wo * co) * x.dtype.itemsize),
        )(xr, xr, w_mat, b_mat)
    else:
        ho, wo = h // 2, w // 2
        # Free row-major reshape -> (n, ho, 2, wo, 2c); the slice is a no-op
        # when H, W are even (it only trims an unused last row/col otherwise).
        xr = x[:, :2 * ho, :2 * wo, :].reshape(n, ho, 2, wo, 2 * c)

        th = _pick_row_tile(ho, wo)
        kern = functools.partial(_avgpool2x2_kernel, c=c)

        out = pl.pallas_call(
            kern,
            out_shape=jax.ShapeDtypeStruct((n, ho, wo, c), x.dtype),
            grid=(n, ho // th),
            in_specs=[pl.BlockSpec((1, th, 2, wo, 2 * c),
                                   lambda b, i: (b, i, 0, 0, 0))],
            out_specs=pl.BlockSpec((1, th, wo, c), lambda b, i: (b, i, 0, 0)),
            compiler_params=params,
            cost_estimate=pl.CostEstimate(
                flops=4 * n * ho * wo * c,
                transcendentals=0,
                bytes_accessed=(xr.size + n * ho * wo * c) * x.dtype.itemsize),
        )(xr)

    return jnp.transpose(out, (0, 3, 1, 2))             # back to NCHW


# ----------------------------------------------------------------------------
# Demo / self-check
# ----------------------------------------------------------------------------
if __name__ == "__main__":
    key = jax.random.PRNGKey(0)
    k_x, k_w, k_b = jax.random.split(key, 3)

    N, C, H, W = 2, 4, 16, 16
    x = jax.random.normal(k_x, (N, C, H, W), dtype=jnp.float32)

    # Deterministic synthetic parameters (Conv2d(C, C, 3) shapes).
    conv_w = 0.1 * jax.random.normal(k_w, (C, C, 3, 3), dtype=jnp.float32)
    conv_b = 0.1 * jax.random.normal(k_b, (C,), dtype=jnp.float32)

    # --- with_conv=True path ---
    y_conv = jax.block_until_ready(downsample(x, conv_w, conv_b, with_conv=True))
    assert y_conv.shape == (N, C, H // 2, W // 2), y_conv.shape

    # Pure-JAX reference: pad (right/bottom by 1) + 3x3 stride-2 VALID conv.
    x_nhwc = jnp.transpose(x, (0, 2, 3, 1))
    x_pad = jnp.pad(x_nhwc, ((0, 0), (0, 1), (0, 1), (0, 0)))
    w_hwio = jnp.transpose(conv_w, (2, 3, 1, 0))
    ref = jax.lax.conv_general_dilated(
        x_pad, w_hwio, window_strides=(2, 2), padding="VALID",
        dimension_numbers=("NHWC", "HWIO", "NHWC"),
        precision=jax.lax.Precision.HIGHEST) + conv_b
    ref = jnp.transpose(ref, (0, 3, 1, 2))
    np.testing.assert_allclose(np.asarray(y_conv), np.asarray(ref),
                               rtol=1e-3, atol=1e-3)

    # --- with_conv=False path (avg_pool2d k=2 s=2) ---
    y_pool = jax.block_until_ready(downsample(x, conv_w, conv_b, with_conv=False))
    assert y_pool.shape == (N, C, H // 2, W // 2), y_pool.shape
    ref_pool = x.reshape(N, C, H // 2, 2, W // 2, 2).mean(axis=(3, 5))
    np.testing.assert_allclose(np.asarray(y_pool), np.asarray(ref_pool),
                               rtol=1e-5, atol=1e-5)

    print("KERNEL_OK")
</pallas_src>

<mosaic_0001>
module attributes {stable_mosaic.version = 11 : i64} {
  func.func @_conv3x3s2_kernel(%arg0: i32, %arg1: i32, %arg2: memref<1x8x2x9x8xf32, #tpu.memory_space<vmem>>, %arg3: memref<1x1x2x9x8xf32, #tpu.memory_space<vmem>>, %arg4: memref<36x4xf32, #tpu.memory_space<vmem>>, %arg5: memref<1x4xf32, #tpu.memory_space<vmem>>, %arg6: memref<1x8x8x4xf32, #tpu.memory_space<vmem>>) attributes {dimension_semantics = [#tpu.dimension_semantics<parallel>, #tpu.dimension_semantics<parallel>], iteration_bounds = array<i64: 2, 1>, scalar_prefetch = 0 : i64, scratch_operands = 0 : i64, tpu.core_type = #tpu.core_type<tc>, window_params = [{transform_indices = @transform_0, window_bounds = array<i64: 1, 8, 2, 9, 8>}, {transform_indices = @transform_1, window_bounds = array<i64: 1, 1, 2, 9, 8>}, {pipeline_mode = #tpu.pipeline_mode<synchronous>, transform_indices = @transform_2, window_bounds = array<i64: 36, 4>}, {pipeline_mode = #tpu.pipeline_mode<synchronous>, transform_indices = @transform_3, window_bounds = array<i64: 1, 4>}, {transform_indices = @transform_4, window_bounds = array<i64: 1, 8, 8, 4>}]} {
    %c0 = arith.constant 0 : index
    %c0_0 = arith.constant 0 : index
    %c0_1 = arith.constant 0 : index
    %c0_2 = arith.constant 0 : index
    %c0_3 = arith.constant 0 : index
    %0 = vector.load %arg2[%c0, %c0_0, %c0_1, %c0_2, %c0_3] : memref<1x8x2x9x8xf32, #tpu.memory_space<vmem>>, vector<1x8x2x9x8xf32>
    %c0_4 = arith.constant 0 : index
    %c0_5 = arith.constant 0 : index
    %c0_6 = arith.constant 0 : index
    %c0_7 = arith.constant 0 : index
    %c0_8 = arith.constant 0 : index
    %1 = vector.load %arg3[%c0_4, %c0_5, %c0_6, %c0_7, %c0_8] : memref<1x1x2x9x8xf32, #tpu.memory_space<vmem>>, vector<1x1x2x9x8xf32>
    %c0_9 = arith.constant 0 : index
    %c0_10 = arith.constant 0 : index
    %2 = vector.load %arg4[%c0_9, %c0_10] : memref<36x4xf32, #tpu.memory_space<vmem>>, vector<36x4xf32>
    %c0_11 = arith.constant 0 : index
    %c0_12 = arith.constant 0 : index
    %3 = vector.load %arg5[%c0_11, %c0_12] : memref<1x4xf32, #tpu.memory_space<vmem>>, vector<1x4xf32>
    %4 = vector.extract_strided_slice %0 {offsets = [0, 0, 0, 0, 0], sizes = [1, 8, 1, 9, 8], strides = [1, 1, 1, 1, 1]} : vector<1x8x2x9x8xf32> to vector<1x8x1x9x8xf32>
    %5 = vector.shape_cast %4 : vector<1x8x1x9x8xf32> to vector<8x9x8xf32>
    %6 = vector.extract_strided_slice %0 {offsets = [0, 0, 1, 0, 0], sizes = [1, 8, 1, 9, 8], strides = [1, 1, 1, 1, 1]} : vector<1x8x2x9x8xf32> to vector<1x8x1x9x8xf32>
    %7 = vector.shape_cast %6 : vector<1x8x1x9x8xf32> to vector<8x9x8xf32>
    %8 = vector.extract_strided_slice %0 {offsets = [0, 1, 0, 0, 0], sizes = [1, 7, 1, 9, 8], strides = [1, 1, 1, 1, 1]} : vector<1x8x2x9x8xf32> to vector<1x7x1x9x8xf32>
    %9 = vector.shape_cast %8 : vector<1x7x1x9x8xf32> to vector<7x9x8xf32>
    %10 = vector.extract_strided_slice %1 {offsets = [0, 0, 0, 0, 0], sizes = [1, 1, 1, 9, 8], strides = [1, 1, 1, 1, 1]} : vector<1x1x2x9x8xf32> to vector<1x1x1x9x8xf32>
    %11 = vector.shape_cast %10 : vector<1x1x1x9x8xf32> to vector<1x9x8xf32>
    %12 = tpu.concatenate %9, %11 in 0 : vector<7x9x8xf32>, vector<1x9x8xf32> -> vector<8x9x8xf32>
    %cst = arith.constant 0.000000e+00 : f32
    %13 = vector.broadcast %cst : f32 to vector<64x4xf32>
    %14 = vector.extract_strided_slice %5 {offsets = [0, 0, 0], sizes = [8, 8, 8], strides = [1, 1, 1]} : vector<8x9x8xf32> to vector<8x8x8xf32>
    %15 = vector.shape_cast %14 : vector<8x8x8xf32> to vector<64x8xf32>
    %16 = vector.extract_strided_slice %2 {offsets = [0, 0], sizes = [8, 4], strides = [1, 1]} : vector<36x4xf32> to vector<8x4xf32>
    %cst_13 = arith.constant dense<0.000000e+00> : vector<64x4xf32>
    %17 = tpu.matmul %15, %16, %cst_13 {dimension_numbers = #tpu.dot_dimension_numbers<[1], [0], [0], [1], [0, 0, 1, 1], [], []>} : vector<64x8xf32>, vector<8x4xf32>, vector<64x4xf32> -> vector<64x4xf32>
    %18 = arith.addf %13, %17 : vector<64x4xf32>
    %19 = vector.extract_strided_slice %5 {offsets = [0, 1, 0], sizes = [8, 8, 4], strides = [1, 1, 1]} : vector<8x9x8xf32> to vector<8x8x4xf32>
    %20 = vector.shape_cast %19 : vector<8x8x4xf32> to vector<64x4xf32>
    %21 = vector.extract_strided_slice %2 {offsets = [8, 0], sizes = [4, 4], strides = [1, 1]} : vector<36x4xf32> to vector<4x4xf32>
    %cst_14 = arith.constant dense<0.000000e+00> : vector<64x4xf32>
    %22 = tpu.matmul %20, %21, %cst_14 {dimension_numbers = #tpu.dot_dimension_numbers<[1], [0], [0], [1], [0, 0, 1, 1], [], []>} : vector<64x4xf32>, vector<4x4xf32>, vector<64x4xf32> -> vector<64x4xf32>
    %23 = arith.addf %18, %22 : vector<64x4xf32>
    %24 = vector.extract_strided_slice %7 {offsets = [0, 0, 0], sizes = [8, 8, 8], strides = [1, 1, 1]} : vector<8x9x8xf32> to vector<8x8x8xf32>
    %25 = vector.shape_cast %24 : vector<8x8x8xf32> to vector<64x8xf32>
    %26 = vector.extract_strided_slice %2 {offsets = [12, 0], sizes = [8, 4], strides = [1, 1]} : vector<36x4xf32> to vector<8x4xf32>
    %cst_15 = arith.constant dense<0.000000e+00> : vector<64x4xf32>
    %27 = tpu.matmul %25, %26, %cst_15 {dimension_numbers = #tpu.dot_dimension_numbers<[1], [0], [0], [1], [0, 0, 1, 1], [], []>} : vector<64x8xf32>, vector<8x4xf32>, vector<64x4xf32> -> vector<64x4xf32>
    %28 = arith.addf %23, %27 : vector<64x4xf32>
    %29 = vector.extract_strided_slice %7 {offsets = [0, 1, 0], sizes = [8, 8, 4], strides = [1, 1, 1]} : vector<8x9x8xf32> to vector<8x8x4xf32>
    %30 = vector.shape_cast %29 : vector<8x8x4xf32> to vector<64x4xf32>
    %31 = vector.extract_strided_slice %2 {offsets = [20, 0], sizes = [4, 4], strides = [1, 1]} : vector<36x4xf32> to vector<4x4xf32>
    %cst_16 = arith.constant dense<0.000000e+00> : vector<64x4xf32>
    %32 = tpu.matmul %30, %31, %cst_16 {dimension_numbers = #tpu.dot_dimension_numbers<[1], [0], [0], [1], [0, 0, 1, 1], [], []>} : vector<64x4xf32>, vector<4x4xf32>, vector<64x4xf32> -> vector<64x4xf32>
    %33 = arith.addf %28, %32 : vector<64x4xf32>
    %34 = vector.extract_strided_slice %12 {offsets = [0, 0, 0], sizes = [8, 8, 8], strides = [1, 1, 1]} : vector<8x9x8xf32> to vector<8x8x8xf32>
    %35 = vector.shape_cast %34 : vector<8x8x8xf32> to vector<64x8xf32>
    %36 = vector.extract_strided_slice %2 {offsets = [24, 0], sizes = [8, 4], strides = [1, 1]} : vector<36x4xf32> to vector<8x4xf32>
    %cst_17 = arith.constant dense<0.000000e+00> : vector<64x4xf32>
    %37 = tpu.matmul %35, %36, %cst_17 {dimension_numbers = #tpu.dot_dimension_numbers<[1], [0], [0], [1], [0, 0, 1, 1], [], []>} : vector<64x8xf32>, vector<8x4xf32>, vector<64x4xf32> -> vector<64x4xf32>
    %38 = arith.addf %33, %37 : vector<64x4xf32>
    %39 = vector.extract_strided_slice %12 {offsets = [0, 1, 0], sizes = [8, 8, 4], strides = [1, 1, 1]} : vector<8x9x8xf32> to vector<8x8x4xf32>
    %40 = vector.shape_cast %39 : vector<8x8x4xf32> to vector<64x4xf32>
    %41 = vector.extract_strided_slice %2 {offsets = [32, 0], sizes = [4, 4], strides = [1, 1]} : vector<36x4xf32> to vector<4x4xf32>
    %cst_18 = arith.constant dense<0.000000e+00> : vector<64x4xf32>
    %42 = tpu.matmul %40, %41, %cst_18 {dimension_numbers = #tpu.dot_dimension_numbers<[1], [0], [0], [1], [0, 0, 1, 1], [], []>} : vector<64x4xf32>, vector<4x4xf32>, vector<64x4xf32> -> vector<64x4xf32>
    %43 = arith.addf %38, %42 : vector<64x4xf32>
    %44 = vector.broadcast %3 : vector<1x4xf32> to vector<64x4xf32>
    %45 = arith.addf %43, %44 : vector<64x4xf32>
    %46 = vector.shape_cast %45 : vector<64x4xf32> to vector<8x8x4xf32>
    %c0_19 = arith.constant 0 : index
    %c0_20 = arith.constant 0 : index
    %c0_21 = arith.constant 0 : index
    %c0_22 = arith.constant 0 : index
    %47 = vector.load %arg6[%c0_19, %c0_20, %c0_21, %c0_22] : memref<1x8x8x4xf32, #tpu.memory_space<vmem>>, vector<1x8x8x4xf32>
    %48 = vector.shape_cast %47 : vector<1x8x8x4xf32> to vector<8x8x4xf32>
    %49 = vector.shape_cast %46 : vector<8x8x4xf32> to vector<1x8x8x4xf32>
    tpu.vector_store %arg6[%c0_19, %c0_20, %c0_21, %c0_22], %49 {strides = array<i32>} : memref<1x8x8x4xf32, #tpu.memory_space<vmem>>, vector<1x8x8x4xf32>,
    return
  }
  func.func @transform_0(%arg0: i32, %arg1: i32) -> (i32, i32, i32, i32, i32) {
    %c0_i32 = arith.constant 0 : i32
    %c0_i32_0 = arith.constant 0 : i32
    %c0_i32_1 = arith.constant 0 : i32
    %c0_i32_2 = arith.constant 0 : i32
    return %arg0, %arg1, %c0_i32, %c0_i32_0, %c0_i32_1 : i32, i32, i32, i32, i32
  }
  func.func @transform_1(%arg0: i32, %arg1: i32) -> (i32, i32, i32, i32, i32) {
    %c1_i32 = arith.constant 1 : i32
    %0 = arith.addi %arg1, %c1_i32 : i32
    %c8_i32 = arith.constant 8 : i32
    %1 = arith.muli %c8_i32, %0 : i32
    %c0_i32 = arith.constant 0 : i32
    %c0_i32_0 = arith.constant 0 : i32
    %c0_i32_1 = arith.constant 0 : i32
    %c0_i32_2 = arith.constant 0 : i32
    return %arg0, %1, %c0_i32, %c0_i32_0, %c0_i32_1 : i32, i32, i32, i32, i32
  }
  func.func @transform_2(%arg0: i32, %arg1: i32) -> (i32, i32) {
    %c0_i32 = arith.constant 0 : i32
    %c0_i32_0 = arith.constant 0 : i32
    %c0_i32_1 = arith.constant 0 : i32
    return %c0_i32, %c0_i32_0 : i32, i32
  }
  func.func @transform_3(%arg0: i32, %arg1: i32) -> (i32, i32) {
    %c0_i32 = arith.constant 0 : i32
    %c0_i32_0 = arith.constant 0 : i32
    %c0_i32_1 = arith.constant 0 : i32
    return %c0_i32, %c0_i32_0 : i32, i32
  }
  func.func @transform_4(%arg0: i32, %arg1: i32) -> (i32, i32, i32, i32) {
    %c0_i32 = arith.constant 0 : i32
    %c0_i32_0 = arith.constant 0 : i32
    %c0_i32_1 = arith.constant 0 : i32
    return %arg0, %arg1, %c0_i32, %c0_i32_0 : i32, i32, i32, i32
  }
}

</mosaic_0001>

<llo_original>
// kernel: downsample.1
$region0: #{downsample.1}
  #allocation0 [shape = 'u32[]', space=smem, size = 0x4, offset = 0x4, fixed_abs, tag = 'smem constant byte address 0x4 - core index']
  #allocation1 [shape = 'u32[144,128]{1,0:T(1,128)}', space=vmem, size = 0x12000, scoped, tag = 'internal scratch']
  %s0 = inlined_call_operand.vmem [shape: f32[2,9,2,9,8], index: 0, kind: input, shape index: {}, may-alias: {0,1}]
  %s1 = inlined_call_operand.vmem [shape: f32[2,9,2,9,8], index: 1, kind: input, shape index: {}, may-alias: {0,1}]
  %s2 = inlined_call_operand.vmem [shape: f32[36,4], index: 2, kind: input, shape index: {}]
  %s3 = inlined_call_operand.vmem [shape: f32[1,4], index: 3, kind: input, shape index: {}]
  %s4 = inlined_call_operand.vmem [shape: f32[2,8,8,4], index: 4, kind: output, shape index: {}]
  %s5 = sld [smem:[#allocation0]]
  $region49: #{downsample.1} parent=0
    _
  %s7 = ssub.s32 1, %s5
  %s8 = scalar_select 0, %s7, %s5
  loop: start=0, step=1, limit=4
  $region2: #{downsample.1} parent=0 // loop_pre_header
    _
  $region3: #{downsample.1} parent=0 // loop_header
    %s10 = sphi 0, %s14
    %p11 = scmp.ge.s32.totalorder %s10, 4
    %s17 = sphi 0, %s29
    %s18 = sphi 0, %s25
    %s19 = sphi 0, %s17
    %s20 = sphi 0, %s18
    %s21 = sphi 0, %s19
    %s22 = sphi 0, %s20
    %s34 = sphi 0, %s36
    %s37 = sphi 0, %s34
    %s38 = sphi 0, %s37
    %s54 = sphi 0, %s38
    %s66 = sphi 0, %s68
    %s69 = sphi 0, %s66
    %s70 = sphi 0, %s69
    %s86 = sphi 0, %s70
    %s90 = sphi 0, %s90
    %s92 = sphi 0, %s90
    %s93 = sphi 0, %s92
    %s107 = sphi 0, %s93
    %s111 = sphi 0, %s111
    %s113 = sphi 0, %s111
    %s114 = sphi 0, %s113
    %s128 = sphi 0, %s114
    %s136 = sphi 0, %s138
    %s139 = sphi 0, %s136
    %s140 = sphi 0, %s139
    %s156 = sphi 0, %s140
  $region4: #{downsample.1} parent=0 // loop_header_branch
    %13 = sbr.rel (%p11) target = $region8
  $region5: #{downsample.1} parent=0 // loop_body
    %s15 = ssub.s32 %s10, 1
    %s16 = ssub.s32 %s10, 2
    %s23 = sadd.s32 1, %s18
    %p24 = scmp.ge.s32.totalorder %s23, 1
    %s25 = scalar_select %p24, 0, %s23
    %s26 = sadd.s32 1, %s17
    %s27 = scalar_select %p24, %s26, %s17
    %p28 = scmp.ge.s32.totalorder %s27, 2
    %s29 = scalar_select %p28, 0, %s27
    %s30 = ssub.s32 %s17, %s29
    %s31 = ssub.s32 %s18, %s25
    %s32 = sor.u32 %s30, %s31
    %p33 = scmp.eq.s32.totalorder %s32, 0
    %s35 = sadd.s32 %s34, 1
    %s36 = scalar_select %p33, %s34, %s35
    %p39 = pneg %p33
    %p40 = scmp.eq.s32.totalorder %s10, 1
    %p41 = por %p39, %p40
    %p42 = scmp.ne.s32.totalorder %s34, %s37
    %p43 = scmp.eq.s32.totalorder %s10, 0
    %p44 = por %p42, %p43
    %p45 = scmp.ne.s32.totalorder %s34, %s37
    %p46 = scmp.eq.s32.totalorder %s15, 1
    %p47 = por %p45, %p46
    %p48 = scmp.ne.s32.totalorder %s37, %s38
    %p49 = scmp.eq.s32.totalorder %s15, 0
    %p50 = por %p48, %p49
    %p51 = scmp.ne.s32.totalorder %s37, %s38
    %p52 = scmp.eq.s32.totalorder %s16, 1
    %p53 = por %p51, %p52
    %p55 = scmp.ne.s32.totalorder %s38, %s54
    %p56 = scmp.eq.s32.totalorder %s16, 0
    %p57 = por %p55, %p56
    %s58 = sadd.s32 %s18, 1
    %s59 = smul.u32 %s58, 8
    %s60 = sadd.s32 %s25, 1
    %s61 = smul.u32 %s60, 8
    %s62 = ssub.s32 %s17, %s29
    %s63 = ssub.s32 %s59, %s61
    %s64 = sor.u32 %s62, %s63
    %p65 = scmp.eq.s32.totalorder %s64, 0
    %s67 = sadd.s32 %s66, 1
    %s68 = scalar_select %p65, %s66, %s67
    %p71 = pneg %p65
    %p72 = scmp.eq.s32.totalorder %s10, 1
    %p73 = por %p71, %p72
    %p74 = scmp.ne.s32.totalorder %s66, %s69
    %p75 = scmp.eq.s32.totalorder %s10, 0
    %p76 = por %p74, %p75
    %p77 = scmp.ne.s32.totalorder %s66, %s69
    %p78 = scmp.eq.s32.totalorder %s15, 1
    %p79 = por %p77, %p78
    %p80 = scmp.ne.s32.totalorder %s69, %s70
    %p81 = scmp.eq.s32.totalorder %s15, 0
    %p82 = por %p80, %p81
    %p83 = scmp.ne.s32.totalorder %s69, %s70
    %p84 = scmp.eq.s32.totalorder %s16, 1
    %p85 = por %p83, %p84
    %p87 = scmp.ne.s32.totalorder %s70, %s86
    %p88 = scmp.eq.s32.totalorder %s16, 0
    %p89 = por %p87, %p88
    %s91 = sadd.s32 %s90, 1
    %p94 = scmp.eq.s32.totalorder %s10, 1
    %p95 = scmp.ne.s32.totalorder %s90, %s92
    %p96 = scmp.eq.s32.totalorder %s10, 0
    %p97 = por %p95, %p96
    %p98 = scmp.ne.s32.totalorder %s90, %s92
    %p99 = scmp.eq.s32.totalorder %s15, 1
    %p100 = por %p98, %p99
    %p101 = scmp.ne.s32.totalorder %s92, %s93
    %p102 = scmp.eq.s32.totalorder %s15, 0
    %p103 = por %p101, %p102
    %p104 = scmp.ne.s32.totalorder %s92, %s93
    %p105 = scmp.eq.s32.totalorder %s16, 1
    %p106 = por %p104, %p105
    %p108 = scmp.ne.s32.totalorder %s93, %s107
    %p109 = scmp.eq.s32.totalorder %s16, 0
    %p110 = por %p108, %p109
    %s112 = sadd.s32 %s111, 1
    %p115 = scmp.eq.s32.totalorder %s10, 1
    %p116 = scmp.ne.s32.totalorder %s111, %s113
    %p117 = scmp.eq.s32.totalorder %s10, 0
    %p118 = por %p116, %p117
    %p119 = scmp.ne.s32.totalorder %s111, %s113
    %p120 = scmp.eq.s32.totalorder %s15, 1
    %p121 = por %p119, %p120
    %p122 = scmp.ne.s32.totalorder %s113, %s114
    %p123 = scmp.eq.s32.totalorder %s15, 0
    %p124 = por %p122, %p123
    %p125 = scmp.ne.s32.totalorder %s113, %s114
    %p126 = scmp.eq.s32.totalorder %s16, 1
    %p127 = por %p125, %p126
    %p129 = scmp.ne.s32.totalorder %s114, %s128
    %p130 = scmp.eq.s32.totalorder %s16, 0
    %p131 = por %p129, %p130
    %s132 = ssub.s32 %s17, %s29
    %s133 = ssub.s32 %s18, %s25
    %s134 = sor.u32 %s132, %s133
    %p135 = scmp.eq.s32.totalorder %s134, 0
    %s137 = sadd.s32 %s136, 1
    %s138 = scalar_select %p135, %s136, %s137
    %p141 = pneg %p135
    %p142 = scmp.eq.s32.totalorder %s10, 1
    %p143 = por %p141, %p142
    %p144 = scmp.ne.s32.totalorder %s136, %s139
    %p145 = scmp.eq.s32.totalorder %s10, 0
    %p146 = por %p144, %p145
    %p147 = scmp.ne.s32.totalorder %s136, %s139
    %p148 = scmp.eq.s32.totalorder %s15, 1
    %p149 = por %p147, %p148
    %p150 = scmp.ne.s32.totalorder %s139, %s140
    %p151 = scmp.eq.s32.totalorder %s15, 0
    %p152 = por %p150, %p151
    %p153 = scmp.ne.s32.totalorder %s139, %s140
    %p154 = scmp.eq.s32.totalorder %s16, 1
    %p155 = por %p153, %p154
    %p157 = scmp.ne.s32.totalorder %s140, %s156
    %p158 = scmp.eq.s32.totalorder %s16, 0
    %p159 = por %p157, %p158
    %p160 = scmp.le.s32.totalorder 1, %s10
    %p161 = scmp.lt.s32.totalorder %s10, 3
    %p162 = pnand %p160, %p161
    %p163 = pneg %p162
    // Predicated region
    $region9: #{downsample.1} parent=5 // pred_check
      _
    $region10: #{downsample.1} parent=5 // pred_check_branch
      %165 = sbr.rel (%p162) target = $region12
    $region11: #{downsample.1} parent=5 // pred_region
      %s166 = ssub.s32 %s10, 1
      // Predicated region
      $region13: #{downsample.1} parent=11 // pred_check
        %p167 = pneg %p103
      $region14: #{downsample.1} parent=11 // pred_check_branch
        %169 = sbr.rel (%p167) target = $region16
      $region15: #{downsample.1} parent=11 // pred_region
        _
      $region16: #{downsample.1} parent=11 // pred_fallthru
        _
      // Predicated region
      $region17: #{downsample.1} parent=11 // pred_check
        %p170 = pneg %p124
      $region18: #{downsample.1} parent=11 // pred_check_branch
        %172 = sbr.rel (%p170) target = $region20
      $region19: #{downsample.1} parent=11 // pred_region
        _
      $region20: #{downsample.1} parent=11 // pred_fallthru
        _
    $region12: #{downsample.1} parent=5 // pred_fallthru
      _
    %p173 = scmp.lt.s32.totalorder %s10, 2
    // Predicated region
    $region21: #{downsample.1} parent=5 // pred_check
      %p174 = pneg %p173
    $region22: #{downsample.1} parent=5 // pred_check_branch
      %176 = sbr.rel (%p174) target = $region24
    $region23: #{downsample.1} parent=5 // pred_region
      // Predicated region
      $region25: #{downsample.1} parent=23 // pred_check
        %p177 = pneg %p44
      $region26: #{downsample.1} parent=23 // pred_check_branch
        %179 = sbr.rel (%p177) target = $region28
      $region27: #{downsample.1} parent=23 // pred_region
        %s180 = smul.u32 8, %s18
        %s181 = ssub.s32 9, %s180
        %p182 = scmp.lt.s32.totalorder %s181, 8
        %s183 = scalar_select %p182, %s181, 8
        %s184 = smul.u32 128, %s183
        %s185 = smul.u32 %s184, 2
        %s186 = smul.u32 %s185, 2
        %p187 = scmp.lt.s32.totalorder %s17, 1
        %s188 = scalar_select %p187, %s17, 1
        %p189 = scmp.lt.s32.totalorder %s180, 8
        %s190 = scalar_select %p189, %s180, 8
        %s191 = smul.addr %s190, 4
        %s192 = smul.addr %s188, 36
        %s193 = sadd.s32 %s191, %s192
        %s194 = smul.addr %s193, 8
        %s195 = scalar_lea.vmem %s0, %s194
        %s196 = smul.u32 8, %s18
        %s197 = ssub.s32 9, %s196
        %p198 = scmp.lt.s32.totalorder %s197, 8
        %s199 = scalar_select %p198, %s197, 8
        %s200 = smul.u32 128, %s199
        %s201 = smul.u32 %s200, 2
        %s202 = smul.u32 %s201, 2
      $region28: #{downsample.1} parent=23 // pred_fallthru
        _
      // Predicated region
      $region29: #{downsample.1} parent=23 // pred_check
        %p203 = pneg %p76
      $region30: #{downsample.1} parent=23 // pred_check_branch
        %205 = sbr.rel (%p203) target = $region32
      $region31: #{downsample.1} parent=23 // pred_region
        %s206 = sadd.s32 %s18, 1
        %s207 = smul.u32 %s206, 8
        %p208 = scmp.lt.s32.totalorder %s17, 1
        %s209 = scalar_select %p208, %s17, 1
        %p210 = scmp.lt.s32.totalorder %s207, 8
        %s211 = scalar_select %p210, %s207, 8
        %s212 = smul.addr %s211, 4
        %s213 = smul.addr %s209, 36
        %s214 = sadd.s32 %s212, %s213
        %s215 = smul.addr %s214, 8
        %s216 = scalar_lea.vmem %s1, %s215
        %s217 = sadd.s32 %s18, 1
        %s218 = smul.u32 %s217, 8
      $region32: #{downsample.1} parent=23 // pred_fallthru
        _
    $region24: #{downsample.1} parent=5 // pred_fallthru
      _
    %p219 = scmp.le.s32.totalorder 1, %s10
    %p220 = scmp.lt.s32.totalorder %s10, 3
    %p221 = pnand %p219, %p220
    %p222 = pneg %p221
    // Predicated region
    $region33: #{downsample.1} parent=5 // pred_check
      _
    $region34: #{downsample.1} parent=5 // pred_check_branch
      %224 = sbr.rel (%p221) target = $region36
    $region35: #{downsample.1} parent=5 // pred_region
      %s225 = ssub.s32 %s10, 1
      %s226 = smul.u32 8, %s20
      %s227 = ssub.s32 9, %s226
      %p228 = scmp.lt.s32.totalorder %s227, 8
      %s229 = scalar_select %p228, %s227, 8
      %s230 = smul.u32 128, %s229
      %s231 = smul.u32 %s230, 2
      %s232 = smul.u32 %s231, 2
      %p233 = scmp.lt.s32.totalorder %s19, 1
      %s234 = scalar_select %p233, %s19, 1
      %p235 = scmp.lt.s32.totalorder %s226, 8
      %s236 = scalar_select %p235, %s226, 8
      %s237 = smul.addr %s236, 4
      %s238 = smul.addr %s234, 36
      %s239 = sadd.s32 %s237, %s238
      %s240 = smul.addr %s239, 8
      %s241 = scalar_lea.vmem %s0, %s240
      %p242 = pneg %p50
      %p243 = pneg %p47
      %s244 = sadd.s32 %s20, 1
      %s245 = smul.u32 %s244, 8
      %p246 = scmp.lt.s32.totalorder %s19, 1
      %s247 = scalar_select %p246, %s19, 1
      %p248 = scmp.lt.s32.totalorder %s245, 8
      %s249 = scalar_select %p248, %s245, 8
      %s250 = smul.addr %s249, 4
      %s251 = smul.addr %s247, 36
      %s252 = sadd.s32 %s250, %s251
      %s253 = smul.addr %s252, 8
      %s254 = scalar_lea.vmem %s1, %s253
      %p255 = pneg %p82
      %p256 = pneg %p79
      %p257 = pneg %p103
      %p258 = pneg %p100
      %p259 = pneg %p124
      %p260 = pneg %p121
      %p261 = pneg %p152
      %p262 = pneg %p149
      %s263 = smul.u32 8, %s20
      %p264 = scmp.lt.s32.totalorder %s19, 1
      %s265 = scalar_select %p264, %s19, 1
      %p266 = scmp.lt.s32.totalorder %s263, 7
      %s267 = scalar_select %p266, %s263, 7
      %s268 = smul.addr %s265, 8
      %s269 = sadd.s32 %s267, %s268
      %s270 = smul.addr %s269, 8
      %s271 = scalar_lea.vmem %s4, %s270
      %s272 = smul.u32 8, %s20
      %s273 = ssub.s32 9, %s272
      %p274 = scmp.lt.s32.totalorder %s273, 8
      %s275 = scalar_select %p274, %s273, 8
      %s276 = smul.u32 128, %s275
      %s277 = smul.u32 %s276, 2
      %s278 = smul.u32 %s277, 2
      %p279 = scmp.lt.s32.totalorder %s19, 1
      %s280 = scalar_select %p279, %s19, 1
      %p281 = scmp.lt.s32.totalorder %s272, 8
      %s282 = scalar_select %p281, %s272, 8
      %s283 = smul.addr %s282, 4
      %s284 = smul.addr %s280, 36
      %s285 = sadd.s32 %s283, %s284
      %s286 = smul.addr %s285, 8
      %s287 = scalar_lea.vmem %s0, %s286
      %s288 = smul.u32 8, %s20
      %s289 = ssub.s32 9, %s288
      %p290 = scmp.lt.s32.totalorder %s289, 8
      %s291 = scalar_select %p290, %s289, 8
      %s292 = smul.u32 128, %s291
      %s293 = smul.u32 %s292, 2
      %s294 = smul.u32 %s293, 2
      %s295 = sadd.s32 %s20, 1
      %s296 = smul.u32 %s295, 8
      %p297 = scmp.lt.s32.totalorder %s19, 1
      %s298 = scalar_select %p297, %s19, 1
      %p299 = scmp.lt.s32.totalorder %s296, 8
      %s300 = scalar_select %p299, %s296, 8
      %s301 = smul.addr %s300, 4
      %s302 = smul.addr %s298, 36
      %s303 = sadd.s32 %s301, %s302
      %s304 = smul.addr %s303, 8
      %s305 = scalar_lea.vmem %s1, %s304
      %s306 = sadd.s32 %s20, 1
      %s307 = smul.u32 %s306, 8
      %s308 = smul.u32 8, %s20
      %p309 = scmp.lt.s32.totalorder %s19, 1
      %s310 = scalar_select %p309, %s19, 1
      %p311 = scmp.lt.s32.totalorder %s308, 7
      %s312 = scalar_select %p311, %s308, 7
      %s313 = smul.addr %s310, 8
      %s314 = sadd.s32 %s312, %s313
      %s315 = smul.addr %s314, 8
      %s316 = scalar_lea.vmem %s4, %s315
      %s317 = smul.u32 8, %s20
      %v318 = vld [vmem:[%s287] sm:$0xff]
      %v319 = vld [vmem:[%s287 + $0x8] sm:$0x1]
      %v320 = vld [vmem:[%s287 + $0x10] sm:$0xff]
      %v321 = vld [vmem:[%s287 + $0x18] sm:$0x1]
      %v322 = vld [vmem:[%s287 + $0x20] sm:$0xff]
      %v323 = vld [vmem:[%s287 + $0x28] sm:$0x1]
      %v324 = vld [vmem:[%s287 + $0x30] sm:$0xff]
      %v325 = vld [vmem:[%s287 + $0x38] sm:$0x1]
      %v326 = vld [vmem:[%s287 + $0x40] sm:$0xff]
      %v327 = vld [vmem:[%s287 + $0x48] sm:$0x1]
      %v328 = vld [vmem:[%s287 + $0x50] sm:$0xff]
      %v329 = vld [vmem:[%s287 + $0x58] sm:$0x1]
      %v330 = vld [vmem:[%s287 + $0x60] sm:$0xff]
      %v331 = vld [vmem:[%s287 + $0x68] sm:$0x1]
      %v332 = vld [vmem:[%s287 + $0x70] sm:$0xff]
      %v333 = vld [vmem:[%s287 + $0x78] sm:$0x1]
      %v334 = vld [vmem:[%s287 + $0x80] sm:$0xff]
      %v335 = vld [vmem:[%s287 + $0x88] sm:$0x1]
      %v336 = vld [vmem:[%s287 + $0x90] sm:$0xff]
      %v337 = vld [vmem:[%s287 + $0x98] sm:$0x1]
      %v338 = vld [vmem:[%s287 + $0xa0] sm:$0xff]
      %v339 = vld [vmem:[%s287 + $0xa8] sm:$0x1]
      %v340 = vld [vmem:[%s287 + $0xb0] sm:$0xff]
      %v341 = vld [vmem:[%s287 + $0xb8] sm:$0x1]
      %v342 = vld [vmem:[%s287 + $0xc0] sm:$0xff]
      %v343 = vld [vmem:[%s287 + $0xc8] sm:$0x1]
      %v344 = vld [vmem:[%s287 + $0xd0] sm:$0xff]
      %v345 = vld [vmem:[%s287 + $0xd8] sm:$0x1]
      %v346 = vld [vmem:[%s287 + $0xe0] sm:$0xff]
      %v347 = vld [vmem:[%s287 + $0xe8] sm:$0x1]
      %v348 = vld [vmem:[%s287 + $0xf0] sm:$0xff]
      %v349 = vld [vmem:[%s287 + $0xf8] sm:$0x1]
      %v350 = vld [vmem:[%s305] sm:$0xff]
      %v351 = vld [vmem:[%s305 + $0x8] sm:$0x1]
      %v352 = vld [vmem:[%s2] sm:$0xff]
      %v353 = vld [vmem:[%s2 + $0x8] sm:$0xff]
      %v354 = vld [vmem:[%s2 + $0x10] sm:$0xff]
      %v355 = vld [vmem:[%s2 + $0x18] sm:$0xff]
      %v356 = vld [vmem:[%s2 + $0x20] sm:$0xf]
      %v357 = vld [vmem:[%s3] sm:$0x1]
      %vm374 = vcmask 1046528
      %v375 = vrot.slane %v318, 1
      %v376 = vrot.slane %v319, 1
      %v377 = vsel %vm374, %v375, %v376
      %v378 = vrot.slane %v322, 1
      %v379 = vrot.slane %v323, 1
      %v380 = vsel %vm374, %v378, %v379
      %v381 = vrot.slane %v326, 1
      %v382 = vrot.slane %v327, 1
      %v383 = vsel %vm374, %v381, %v382
      %v384 = vrot.slane %v330, 1
      %v385 = vrot.slane %v331, 1
      %v386 = vsel %vm374, %v384, %v385
      %v387 = vrot.slane %v334, 1
      %v388 = vrot.slane %v335, 1
      %v389 = vsel %vm374, %v387, %v388
      %v390 = vrot.slane %v338, 1
      %v391 = vrot.slane %v339, 1
      %v392 = vsel %vm374, %v390, %v391
      %v393 = vrot.slane %v342, 1
      %v394 = vrot.slane %v343, 1
      %v395 = vsel %vm374, %v393, %v394
      %v396 = vrot.slane %v346, 1
      %v397 = vrot.slane %v347, 1
      %v398 = vsel %vm374, %v396, %v397
      %vm399 = vcmask 31744
      %v400 = vsel %vm399, %v377, 0
      %v402 = vsel %vm399, %v380, 0
      %v404 = vsel %vm399, %v383, 0
      %v406 = vsel %vm399, %v386, 0
      %v408 = vsel %vm399, %v389, 0
      %v410 = vsel %vm399, %v392, 0
      %v412 = vsel %vm399, %v395, 0
      %v414 = vsel %vm399, %v398, 0
      %vm416 = vcmask 1043456
      %v418 = vsel %vm416, %v353, 0
      %420 = vmatprep.subr.mxu0 0.0
      %421 = vmatpush1.msra.mxu0 %v418
      %422 = vmatprep.subr.mxu0 0.0
      %423 = vmatpush1.msra.mxu0 0.0
      %424 = vmatprep.subr.mxu0 0.0
      %425 = vmatpush1.msra.mxu0 0.0
      %426 = vmatprep.subr.mxu0 0.0
      %427 = vmatpush1.msra.mxu0 0.0
      %428 = vmatprep.subr.mxu0 0.0
      %429 = vmatpush1.msra.mxu0 0.0
      %430 = vmatprep.subr.mxu0 0.0
      %431 = vmatpush1.msra.mxu0 0.0
      %432 = vmatprep.subr.mxu0 0.0
      %433 = vmatpush1.msra.mxu0 0.0
      %434 = vmatprep.subr.mxu0 0.0
      %435 = vmatpush1.msra.mxu0 0.0
      %436 = vmatprep.subr.mxu0 0.0
      %437 = vmatpush1.msra.mxu0 0.0
      %438 = vmatprep.subr.mxu0 0.0
      %439 = vmatpush1.msra.mxu0 0.0
      %440 = vmatprep.subr.mxu0 0.0
      %441 = vmatpush1.msra.mxu0 0.0
      %442 = vmatprep.subr.mxu0 0.0
      %443 = vmatpush1.msra.mxu0 0.0
      %444 = vmatprep.subr.mxu0 0.0
      %445 = vmatpush1.msra.mxu0 0.0
      %446 = vmatprep.subr.mxu0 0.0
      %447 = vmatpush1.msra.mxu0 0.0
      %448 = vmatprep.subr.mxu0 0.0
      %449 = vmatpush1.msra.mxu0 0.0
      %450 = vmatprep.subr.mxu0 0.0
      %451 = vmatpush1.msra.mxu0 0.0
      %452 = vmatprep.subr.mxu0 0.0
      %453 = vmatpush1.msra.mxu0 0.0
      %454 = vmatprep.subr.mxu0 0.0
      %455 = vmatpush1.msra.mxu0 0.0
      %456 = vmatprep.subr.mxu0 0.0
      %457 = vmatpush1.msra.mxu0 0.0
      %458 = vmatprep.subr.mxu0 0.0
      %459 = vmatpush1.msra.mxu0 0.0
      %460 = vmatprep.subr.mxu0 0.0
      %461 = vmatpush1.msra.mxu0 0.0
      %462 = vmatprep.subr.mxu0 0.0
      %463 = vmatpush1.msra.mxu0 0.0
      %464 = vmatprep.subr.mxu0 0.0
      %465 = vmatpush1.msra.mxu0 0.0
      %466 = vmatprep.subr.mxu0 0.0
      %467 = vmatpush1.msra.mxu0 0.0
      %468 = vmatprep.subr.mxu0 0.0
      %469 = vmatpush1.msra.mxu0 0.0
      %470 = vmatprep.subr.mxu0 0.0
      %471 = vmatpush1.msra.mxu0 0.0
      %472 = vmatprep.subr.mxu0 0.0
      %473 = vmatpush1.msra.mxu0 0.0
      %474 = vmatprep.subr.mxu0 0.0
      %475 = vmatpush1.msra.mxu0 0.0
      %476 = vmatprep.subr.mxu0 0.0
      %477 = vmatpush1.msra.mxu0 0.0
      %478 = vmatprep.subr.mxu0 0.0
      %479 = vmatpush1.msra.mxu0 0.0
      %480 = vmatprep.subr.mxu0 0.0
      %481 = vmatpush1.msra.mxu0 0.0
      %482 = vmatprep.subr.mxu0 0.0
      %483 = vmatpush1.msra.mxu0 0.0
      %484 = vmatprep.mubr.f32.mxu0 0.0
      %485 = vmatmul.mubr.f32.gmra.mrb[0].mxu0 %v400
      %v486 = vpop.f32.mrb[0].mxu0
      %v487 = vadd.f32 0.0, %v486
      %v488 = vpop.f32.mrb[0].mxu0
      %489 = vmatprep.mubr.f32.mxu0 0.0
      %490 = vmatmul.mubr.f32.gmra.mrb[0].mxu0 %v402
      %v491 = vpop.f32.mrb[0].mxu0
      %v492 = vadd.f32 0.0, %v491
      %v493 = vpop.f32.mrb[0].mxu0
      %494 = vmatprep.mubr.f32.mxu0 0.0
      %495 = vmatmul.mubr.f32.gmra.mrb[0].mxu0 %v404
      %v496 = vpop.f32.mrb[0].mxu0
      %v497 = vadd.f32 0.0, %v496
      %v498 = vpop.f32.mrb[0].mxu0
      %499 = vmatprep.mubr.f32.mxu0 0.0
      %500 = vmatmul.mubr.f32.gmra.mrb[0].mxu0 %v406
      %v501 = vpop.f32.mrb[0].mxu0
      %v502 = vadd.f32 0.0, %v501
      %v503 = vpop.f32.mrb[0].mxu0
      %504 = vmatprep.mubr.f32.mxu0 0.0
      %505 = vmatmul.mubr.f32.gmra.mrb[0].mxu0 %v408
      %v506 = vpop.f32.mrb[0].mxu0
      %v507 = vadd.f32 0.0, %v506
      %v508 = vpop.f32.mrb[0].mxu0
      %509 = vmatprep.mubr.f32.mxu0 0.0
      %510 = vmatmul.mubr.f32.gmra.mrb[0].mxu0 %v410
      %v511 = vpop.f32.mrb[0].mxu0
      %v512 = vadd.f32 0.0, %v511
      %v513 = vpop.f32.mrb[0].mxu0
      %514 = vmatprep.mubr.f32.mxu0 0.0
      %515 = vmatmul.mubr.f32.gmra.mrb[0].mxu0 %v412
      %v516 = vpop.f32.mrb[0].mxu0
      %v517 = vadd.f32 0.0, %v516
      %v518 = vpop.f32.mrb[0].mxu0
      %519 = vmatprep.mubr.f32.mxu0 0.0
      %520 = vmatmul.mubr.f32.gmra.mrb[0].mxu0 %v414
      %v521 = vpop.f32.mrb[0].mxu0
      %v522 = vadd.f32 0.0, %v521
      %v523 = vpop.f32.mrb[0].mxu0
      %524 = vdwg.mxu0
      %vm525 = vcmask 64512
      %v526 = vsel %vm525, %v318, 0
      %v528 = vsel %vm525, %v322, 0
      %v530 = vsel %vm525, %v326, 0
      %v532 = vsel %vm525, %v330, 0
      %v534 = vsel %vm525, %v334, 0
      %v536 = vsel %vm525, %v338, 0
      %v538 = vsel %vm525, %v342, 0
      %v540 = vsel %vm525, %v346, 0
      %542 = vmatprep.subr.mxu0 0.0
      %543 = vmatpush1.msra.mxu0 %v352
      %544 = vmatprep.subr.mxu0 0.0
      %545 = vmatpush1.msra.mxu0 0.0
      %546 = vmatprep.subr.mxu0 0.0
      %547 = vmatpush1.msra.mxu0 0.0
      %548 = vmatprep.subr.mxu0 0.0
      %549 = vmatpush1.msra.mxu0 0.0
      %550 = vmatprep.subr.mxu0 0.0
      %551 = vmatpush1.msra.mxu0 0.0
      %552 = vmatprep.subr.mxu0 0.0
      %553 = vmatpush1.msra.mxu0 0.0
      %554 = vmatprep.subr.mxu0 0.0
      %555 = vmatpush1.msra.mxu0 0.0
      %556 = vmatprep.subr.mxu0 0.0
      %557 = vmatpush1.msra.mxu0 0.0
      %558 = vmatprep.subr.mxu0 0.0
      %559 = vmatpush1.msra.mxu0 0.0
      %560 = vmatprep.subr.mxu0 0.0
      %561 = vmatpush1.msra.mxu0 0.0
      %562 = vmatprep.subr.mxu0 0.0
      %563 = vmatpush1.msra.mxu0 0.0
      %564 = vmatprep.subr.mxu0 0.0
      %565 = vmatpush1.msra.mxu0 0.0
      %566 = vmatprep.subr.mxu0 0.0
      %567 = vmatpush1.msra.mxu0 0.0
      %568 = vmatprep.subr.mxu0 0.0
      %569 = vmatpush1.msra.mxu0 0.0
      %570 = vmatprep.subr.mxu0 0.0
      %571 = vmatpush1.msra.mxu0 0.0
      %572 = vmatprep.subr.mxu0 0.0
      %573 = vmatpush1.msra.mxu0 0.0
      %574 = vmatprep.subr.mxu0 0.0
      %575 = vmatpush1.msra.mxu0 0.0
      %576 = vmatprep.subr.mxu0 0.0
      %577 = vmatpush1.msra.mxu0 0.0
      %578 = vmatprep.subr.mxu0 0.0
      %579 = vmatpush1.msra.mxu0 0.0
      %580 = vmatprep.subr.mxu0 0.0
      %581 = vmatpush1.msra.mxu0 0.0
      %582 = vmatprep.subr.mxu0 0.0
      %583 = vmatpush1.msra.mxu0 0.0
      %584 = vmatprep.subr.mxu0 0.0
      %585 = vmatpush1.msra.mxu0 0.0
      %586 = vmatprep.subr.mxu0 0.0
      %587 = vmatpush1.msra.mxu0 0.0
      %588 = vmatprep.subr.mxu0 0.0
      %589 = vmatpush1.msra.mxu0 0.0
      %590 = vmatprep.subr.mxu0 0.0
      %591 = vmatpush1.msra.mxu0 0.0
      %592 = vmatprep.subr.mxu0 0.0
      %593 = vmatpush1.msra.mxu0 0.0
      %594 = vmatprep.subr.mxu0 0.0
      %595 = vmatpush1.msra.mxu0 0.0
      %596 = vmatprep.subr.mxu0 0.0
      %597 = vmatpush1.msra.mxu0 0.0
      %598 = vmatprep.subr.mxu0 0.0
      %599 = vmatpush1.msra.mxu0 0.0
      %600 = vmatprep.subr.mxu0 0.0
      %601 = vmatpush1.msra.mxu0 0.0
      %602 = vmatprep.subr.mxu0 0.0
      %603 = vmatpush1.msra.mxu0 0.0
      %604 = vmatprep.subr.mxu0 0.0
      %605 = vmatpush1.msra.mxu0 0.0
      %606 = vmatprep.mubr.f32.mxu0 0.0
      %607 = vmatmul.mubr.f32.gmra.mrb[0].mxu0 %v526
      %v608 = vpop.f32.mrb[0].mxu0
      %v609 = vadd.f32 %v487, %v608
      %v610 = vpop.f32.mrb[0].mxu0
      %611 = vmatprep.mubr.f32.mxu0 0.0
      %612 = vmatmul.mubr.f32.gmra.mrb[0].mxu0 %v528
      %v613 = vpop.f32.mrb[0].mxu0
      %v614 = vadd.f32 %v492, %v613
      %v615 = vpop.f32.mrb[0].mxu0
      %616 = vmatprep.mubr.f32.mxu0 0.0
      %617 = vmatmul.mubr.f32.gmra.mrb[0].mxu0 %v530
      %v618 = vpop.f32.mrb[0].mxu0
      %v619 = vadd.f32 %v497, %v618
      %v620 = vpop.f32.mrb[0].mxu0
      %621 = vmatprep.mubr.f32.mxu0 0.0
      %622 = vmatmul.mubr.f32.gmra.mrb[0].mxu0 %v532
      %v623 = vpop.f32.mrb[0].mxu0
      %v624 = vadd.f32 %v502, %v623
      %v625 = vpop.f32.mrb[0].mxu0
      %626 = vmatprep.mubr.f32.mxu0 0.0
      %627 = vmatmul.mubr.f32.gmra.mrb[0].mxu0 %v534
      %v628 = vpop.f32.mrb[0].mxu0
      %v629 = vadd.f32 %v507, %v628
      %v630 = vpop.f32.mrb[0].mxu0
      %631 = vmatprep.mubr.f32.mxu0 0.0
      %632 = vmatmul.mubr.f32.gmra.mrb[0].mxu0 %v536
      %v633 = vpop.f32.mrb[0].mxu0
      %v634 = vadd.f32 %v512, %v633
      %v635 = vpop.f32.mrb[0].mxu0
      %636 = vmatprep.mubr.f32.mxu0 0.0
      %637 = vmatmul.mubr.f32.gmra.mrb[0].mxu0 %v538
      %v638 = vpop.f32.mrb[0].mxu0
      %v639 = vadd.f32 %v517, %v638
      %v640 = vpop.f32.mrb[0].mxu0
      %641 = vmatprep.mubr.f32.mxu0 0.0
      %642 = vmatmul.mubr.f32.gmra.mrb[0].mxu0 %v540
      %v643 = vpop.f32.mrb[0].mxu0
      %v644 = vadd.f32 %v522, %v643
      %v645 = vpop.f32.mrb[0].mxu0
      %646 = vdwg.mxu0
      %v648 = vrot.slane %v353, 4
      %v649 = vrot.slane %v354, 4
      %v650 = vsel %vm416, %v648, %v649
      %v653 = vsel %vm525, %v320, 0
      %v656 = vsel %vm525, %v324, 0
      %v659 = vsel %vm525, %v328, 0
      %v662 = vsel %vm525, %v332, 0
      %v665 = vsel %vm525, %v336, 0
      %v668 = vsel %vm525, %v340, 0
      %v671 = vsel %vm525, %v344, 0
      %v674 = vsel %vm525, %v348, 0
      %676 = vmatprep.subr.mxu0 0.0
      %677 = vmatpush1.msra.mxu0 %v650
      %678 = vmatprep.subr.mxu0 0.0
      %679 = vmatpush1.msra.mxu0 0.0
      %680 = vmatprep.subr.mxu0 0.0
      %681 = vmatpush1.msra.mxu0 0.0
      %682 = vmatprep.subr.mxu0 0.0
      %683 = vmatpush1.msra.mxu0 0.0
      %684 = vmatprep.subr.mxu0 0.0
      %685 = vmatpush1.msra.mxu0 0.0
      %686 = vmatprep.subr.mxu0 0.0
      %687 = vmatpush1.msra.mxu0 0.0
      %688 = vmatprep.subr.mxu0 0.0
      %689 = vmatpush1.msra.mxu0 0.0
      %690 = vmatprep.subr.mxu0 0.0
      %691 = vmatpush1.msra.mxu0 0.0
      %692 = vmatprep.subr.mxu0 0.0
      %693 = vmatpush1.msra.mxu0 0.0
      %694 = vmatprep.subr.mxu0 0.0
      %695 = vmatpush1.msra.mxu0 0.0
      %696 = vmatprep.subr.mxu0 0.0
      %697 = vmatpush1.msra.mxu0 0.0
      %698 = vmatprep.subr.mxu0 0.0
      %699 = vmatpush1.msra.mxu0 0.0
      %700 = vmatprep.subr.mxu0 0.0
      %701 = vmatpush1.msra.mxu0 0.0
      %702 = vmatprep.subr.mxu0 0.0
      %703 = vmatpush1.msra.mxu0 0.0
      %704 = vmatprep.subr.mxu0 0.0
      %705 = vmatpush1.msra.mxu0 0.0
      %706 = vmatprep.subr.mxu0 0.0
      %707 = vmatpush1.msra.mxu0 0.0
      %708 = vmatprep.subr.mxu0 0.0
      %709 = vmatpush1.msra.mxu0 0.0
      %710 = vmatprep.subr.mxu0 0.0
      %711 = vmatpush1.msra.mxu0 0.0
      %712 = vmatprep.subr.mxu0 0.0
      %713 = vmatpush1.msra.mxu0 0.0
      %714 = vmatprep.subr.mxu0 0.0
      %715 = vmatpush1.msra.mxu0 0.0
      %716 = vmatprep.subr.mxu0 0.0
      %717 = vmatpush1.msra.mxu0 0.0
      %718 = vmatprep.subr.mxu0 0.0
      %719 = vmatpush1.msra.mxu0 0.0
      %720 = vmatprep.subr.mxu0 0.0
      %721 = vmatpush1.msra.mxu0 0.0
      %722 = vmatprep.subr.mxu0 0.0
      %723 = vmatpush1.msra.mxu0 0.0
      %724 = vmatprep.subr.mxu0 0.0
      %725 = vmatpush1.msra.mxu0 0.0
      %726 = vmatprep.subr.mxu0 0.0
      %727 = vmatpush1.msra.mxu0 0.0
      %728 = vmatprep.subr.mxu0 0.0
      %729 = vmatpush1.msra.mxu0 0.0
      %730 = vmatprep.subr.mxu0 0.0
      %731 = vmatpush1.msra.mxu0 0.0
      %732 = vmatprep.subr.mxu0 0.0
      %733 = vmatpush1.msra.mxu0 0.0
      %734 = vmatprep.subr.mxu0 0.0
      %735 = vmatpush1.msra.mxu0 0.0
      %736 = vmatprep.subr.mxu0 0.0
      %737 = vmatpush1.msra.mxu0 0.0
      %738 = vmatprep.subr.mxu0 0.0
      %739 = vmatpush1.msra.mxu0 0.0
      %740 = vmatprep.mubr.f32.mxu0 0.0
      %741 = vmatmul.mubr.f32.gmra.mrb[0].mxu0 %v653
      %v742 = vpop.f32.mrb[0].mxu0
      %v743 = vadd.f32 0.0, %v742
      %v744 = vpop.f32.mrb[0].mxu0
      %745 = vmatprep.mubr.f32.mxu0 0.0
      %746 = vmatmul.mubr.f32.gmra.mrb[0].mxu0 %v656
      %v747 = vpop.f32.mrb[0].mxu0
      %v748 = vadd.f32 0.0, %v747
      %v749 = vpop.f32.mrb[0].mxu0
      %750 = vmatprep.mubr.f32.mxu0 0.0
      %751 = vmatmul.mubr.f32.gmra.mrb[0].mxu0 %v659
      %v752 = vpop.f32.mrb[0].mxu0
      %v753 = vadd.f32 0.0, %v752
      %v754 = vpop.f32.mrb[0].mxu0
      %755 = vmatprep.mubr.f32.mxu0 0.0
      %756 = vmatmul.mubr.f32.gmra.mrb[0].mxu0 %v662
      %v757 = vpop.f32.mrb[0].mxu0
      %v758 = vadd.f32 0.0, %v757
      %v759 = vpop.f32.mrb[0].mxu0
      %760 = vmatprep.mubr.f32.mxu0 0.0
      %761 = vmatmul.mubr.f32.gmra.mrb[0].mxu0 %v665
      %v762 = vpop.f32.mrb[0].mxu0
      %v763 = vadd.f32 0.0, %v762
      %v764 = vpop.f32.mrb[0].mxu0
      %765 = vmatprep.mubr.f32.mxu0 0.0
      %766 = vmatmul.mubr.f32.gmra.mrb[0].mxu0 %v668
      %v767 = vpop.f32.mrb[0].mxu0
      %v768 = vadd.f32 0.0, %v767
      %v769 = vpop.f32.mrb[0].mxu0
      %770 = vmatprep.mubr.f32.mxu0 0.0
      %771 = vmatmul.mubr.f32.gmra.mrb[0].mxu0 %v671
      %v772 = vpop.f32.mrb[0].mxu0
      %v773 = vadd.f32 0.0, %v772
      %v774 = vpop.f32.mrb[0].mxu0
      %775 = vmatprep.mubr.f32.mxu0 0.0
      %776 = vmatmul.mubr.f32.gmra.mrb[0].mxu0 %v674
      %v777 = vpop.f32.mrb[0].mxu0
      %v778 = vadd.f32 0.0, %v777
      %v779 = vpop.f32.mrb[0].mxu0
      %780 = vdwg.mxu0
      %v781 = vadd.f32 %v609, %v743
      %v782 = vadd.f32 %v614, %v748
      %v783 = vadd.f32 %v619, %v753
      %v784 = vadd.f32 %v624, %v758
      %v785 = vadd.f32 %v629, %v763
      %v786 = vadd.f32 %v634, %v768
      %v787 = vadd.f32 %v639, %v773
      %v788 = vadd.f32 %v644, %v778
      %v797 = vrot.slane %v320, 1
      %v798 = vrot.slane %v321, 1
      %v799 = vsel %vm374, %v797, %v798
      %v800 = vrot.slane %v324, 1
      %v801 = vrot.slane %v325, 1
      %v802 = vsel %vm374, %v800, %v801
      %v803 = vrot.slane %v328, 1
      %v804 = vrot.slane %v329, 1
      %v805 = vsel %vm374, %v803, %v804
      %v806 = vrot.slane %v332, 1
      %v807 = vrot.slane %v333, 1
      %v808 = vsel %vm374, %v806, %v807
      %v809 = vrot.slane %v336, 1
      %v810 = vrot.slane %v337, 1
      %v811 = vsel %vm374, %v809, %v810
      %v812 = vrot.slane %v340, 1
      %v813 = vrot.slane %v341, 1
      %v814 = vsel %vm374, %v812, %v813
      %v815 = vrot.slane %v344, 1
      %v816 = vrot.slane %v345, 1
      %v817 = vsel %vm374, %v815, %v816
      %v818 = vrot.slane %v348, 1
      %v819 = vrot.slane %v349, 1
      %v820 = vsel %vm374, %v818, %v819
      %v821 = vsel %vm399, %v799, 0
      %v823 = vsel %vm399, %v802, 0
      %v825 = vsel %vm399, %v805, 0
      %v827 = vsel %vm399, %v808, 0
      %v829 = vsel %vm399, %v811, 0
      %v831 = vsel %vm399, %v814, 0
      %v833 = vsel %vm399, %v817, 0
      %v835 = vsel %vm399, %v820, 0
      %v837 = vsel %vm416, %v649, 0
      %839 = vmatprep.subr.mxu0 0.0
      %840 = vmatpush1.msra.mxu0 %v837
      %841 = vmatprep.subr.mxu0 0.0
      %842 = vmatpush1.msra.mxu0 0.0
      %843 = vmatprep.subr.mxu0 0.0
      %844 = vmatpush1.msra.mxu0 0.0
      %845 = vmatprep.subr.mxu0 0.0
      %846 = vmatpush1.msra.mxu0 0.0
      %847 = vmatprep.subr.mxu0 0.0
      %848 = vmatpush1.msra.mxu0 0.0
      %849 = vmatprep.subr.mxu0 0.0
      %850 = vmatpush1.msra.mxu0 0.0
      %851 = vmatprep.subr.mxu0 0.0
      %852 = vmatpush1.msra.mxu0 0.0
      %853 = vmatprep.subr.mxu0 0.0
      %854 = vmatpush1.msra.mxu0 0.0
      %855 = vmatprep.subr.mxu0 0.0
      %856 = vmatpush1.msra.mxu0 0.0
      %857 = vmatprep.subr.mxu0 0.0
      %858 = vmatpush1.msra.mxu0 0.0
      %859 = vmatprep.subr.mxu0 0.0
      %860 = vmatpush1.msra.mxu0 0.0
      %861 = vmatprep.subr.mxu0 0.0
      %862 = vmatpush1.msra.mxu0 0.0
      %863 = vmatprep.subr.mxu0 0.0
      %864 = vmatpush1.msra.mxu0 0.0
      %865 = vmatprep.subr.mxu0 0.0
      %866 = vmatpush1.msra.mxu0 0.0
      %867 = vmatprep.subr.mxu0 0.0
      %868 = vmatpush1.msra.mxu0 0.0
      %869 = vmatprep.subr.mxu0 0.0
      %870 = vmatpush1.msra.mxu0 0.0
      %871 = vmatprep.subr.mxu0 0.0
      %872 = vmatpush1.msra.mxu0 0.0
      %873 = vmatprep.subr.mxu0 0.0
      %874 = vmatpush1.msra.mxu0 0.0
      %875 = vmatprep.subr.mxu0 0.0
      %876 = vmatpush1.msra.mxu0 0.0
      %877 = vmatprep.subr.mxu0 0.0
      %878 = vmatpush1.msra.mxu0 0.0
      %879 = vmatprep.subr.mxu0 0.0
      %880 = vmatpush1.msra.mxu0 0.0
      %881 = vmatprep.subr.mxu0 0.0
      %882 = vmatpush1.msra.mxu0 0.0
      %883 = vmatprep.subr.mxu0 0.0
      %884 = vmatpush1.msra.mxu0 0.0
      %885 = vmatprep.subr.mxu0 0.0
      %886 = vmatpush1.msra.mxu0 0.0
      %887 = vmatprep.subr.mxu0 0.0
      %888 = vmatpush1.msra.mxu0 0.0
      %889 = vmatprep.subr.mxu0 0.0
      %890 = vmatpush1.msra.mxu0 0.0
      %891 = vmatprep.subr.mxu0 0.0
      %892 = vmatpush1.msra.mxu0 0.0
      %893 = vmatprep.subr.mxu0 0.0
      %894 = vmatpush1.msra.mxu0 0.0
      %895 = vmatprep.subr.mxu0 0.0
      %896 = vmatpush1.msra.mxu0 0.0
      %897 = vmatprep.subr.mxu0 0.0
      %898 = vmatpush1.msra.mxu0 0.0
      %899 = vmatprep.subr.mxu0 0.0
      %900 = vmatpush1.msra.mxu0 0.0
      %901 = vmatprep.subr.mxu0 0.0
      %902 = vmatpush1.msra.mxu0 0.0
      %903 = vmatprep.mubr.f32.mxu0 0.0
      %904 = vmatmul.mubr.f32.gmra.mrb[0].mxu0 %v821
      %v905 = vpop.f32.mrb[0].mxu0
      %v906 = vadd.f32 0.0, %v905
      %v907 = vpop.f32.mrb[0].mxu0
      %908 = vmatprep.mubr.f32.mxu0 0.0
      %909 = vmatmul.mubr.f32.gmra.mrb[0].mxu0 %v823
      %v910 = vpop.f32.mrb[0].mxu0
      %v911 = vadd.f32 0.0, %v910
      %v912 = vpop.f32.mrb[0].mxu0
      %913 = vmatprep.mubr.f32.mxu0 0.0
      %914 = vmatmul.mubr.f32.gmra.mrb[0].mxu0 %v825
      %v915 = vpop.f32.mrb[0].mxu0
      %v916 = vadd.f32 0.0, %v915
      %v917 = vpop.f32.mrb[0].mxu0
      %918 = vmatprep.mubr.f32.mxu0 0.0
      %919 = vmatmul.mubr.f32.gmra.mrb[0].mxu0 %v827
      %v920 = vpop.f32.mrb[0].mxu0
      %v921 = vadd.f32 0.0, %v920
      %v922 = vpop.f32.mrb[0].mxu0
      %923 = vmatprep.mubr.f32.mxu0 0.0
      %924 = vmatmul.mubr.f32.gmra.mrb[0].mxu0 %v829
      %v925 = vpop.f32.mrb[0].mxu0
      %v926 = vadd.f32 0.0, %v925
      %v927 = vpop.f32.mrb[0].mxu0
      %928 = vmatprep.mubr.f32.mxu0 0.0
      %929 = vmatmul.mubr.f32.gmra.mrb[0].mxu0 %v831
      %v930 = vpop.f32.mrb[0].mxu0
      %v931 = vadd.f32 0.0, %v930
      %v932 = vpop.f32.mrb[0].mxu0
      %933 = vmatprep.mubr.f32.mxu0 0.0
      %934 = vmatmul.mubr.f32.gmra.mrb[0].mxu0 %v833
      %v935 = vpop.f32.mrb[0].mxu0
      %v936 = vadd.f32 0.0, %v935
      %v937 = vpop.f32.mrb[0].mxu0
      %938 = vmatprep.mubr.f32.mxu0 0.0
      %939 = vmatmul.mubr.f32.gmra.mrb[0].mxu0 %v835
      %v940 = vpop.f32.mrb[0].mxu0
      %v941 = vadd.f32 0.0, %v940
      %v942 = vpop.f32.mrb[0].mxu0
      %943 = vdwg.mxu0
      %v944 = vadd.f32 %v781, %v906
      %v945 = vadd.f32 %v782, %v911
      %v946 = vadd.f32 %v783, %v916
      %v947 = vadd.f32 %v784, %v921
      %v948 = vadd.f32 %v785, %v926
      %v949 = vadd.f32 %v786, %v931
      %v950 = vadd.f32 %v787, %v936
      %v951 = vadd.f32 %v788, %v941
      %v953 = vsel %vm525, %v350, 0
      %955 = vmatprep.subr.mxu0 0.0
      %956 = vmatpush1.msra.mxu0 %v355
      %957 = vmatprep.subr.mxu0 0.0
      %958 = vmatpush1.msra.mxu0 0.0
      %959 = vmatprep.subr.mxu0 0.0
      %960 = vmatpush1.msra.mxu0 0.0
      %961 = vmatprep.subr.mxu0 0.0
      %962 = vmatpush1.msra.mxu0 0.0
      %963 = vmatprep.subr.mxu0 0.0
      %964 = vmatpush1.msra.mxu0 0.0
      %965 = vmatprep.subr.mxu0 0.0
      %966 = vmatpush1.msra.mxu0 0.0
      %967 = vmatprep.subr.mxu0 0.0
      %968 = vmatpush1.msra.mxu0 0.0
      %969 = vmatprep.subr.mxu0 0.0
      %970 = vmatpush1.msra.mxu0 0.0
      %971 = vmatprep.subr.mxu0 0.0
      %972 = vmatpush1.msra.mxu0 0.0
      %973 = vmatprep.subr.mxu0 0.0
      %974 = vmatpush1.msra.mxu0 0.0
      %975 = vmatprep.subr.mxu0 0.0
      %976 = vmatpush1.msra.mxu0 0.0
      %977 = vmatprep.subr.mxu0 0.0
      %978 = vmatpush1.msra.mxu0 0.0
      %979 = vmatprep.subr.mxu0 0.0
      %980 = vmatpush1.msra.mxu0 0.0
      %981 = vmatprep.subr.mxu0 0.0
      %982 = vmatpush1.msra.mxu0 0.0
      %983 = vmatprep.subr.mxu0 0.0
      %984 = vmatpush1.msra.mxu0 0.0
      %985 = vmatprep.subr.mxu0 0.0
      %986 = vmatpush1.msra.mxu0 0.0
      %987 = vmatprep.subr.mxu0 0.0
      %988 = vmatpush1.msra.mxu0 0.0
      %989 = vmatprep.subr.mxu0 0.0
      %990 = vmatpush1.msra.mxu0 0.0
      %991 = vmatprep.subr.mxu0 0.0
      %992 = vmatpush1.msra.mxu0 0.0
      %993 = vmatprep.subr.mxu0 0.0
      %994 = vmatpush1.msra.mxu0 0.0
      %995 = vmatprep.subr.mxu0 0.0
      %996 = vmatpush1.msra.mxu0 0.0
      %997 = vmatprep.subr.mxu0 0.0
      %998 = vmatpush1.msra.mxu0 0.0
      %999 = vmatprep.subr.mxu0 0.0
      %1000 = vmatpush1.msra.mxu0 0.0
      %1001 = vmatprep.subr.mxu0 0.0
      %1002 = vmatpush1.msra.mxu0 0.0
      %1003 = vmatprep.subr.mxu0 0.0
      %1004 = vmatpush1.msra.mxu0 0.0
      %1005 = vmatprep.subr.mxu0 0.0
      %1006 = vmatpush1.msra.mxu0 0.0
      %1007 = vmatprep.subr.mxu0 0.0
      %1008 = vmatpush1.msra.mxu0 0.0
      %1009 = vmatprep.subr.mxu0 0.0
      %1010 = vmatpush1.msra.mxu0 0.0
      %1011 = vmatprep.subr.mxu0 0.0
      %1012 = vmatpush1.msra.mxu0 0.0
      %1013 = vmatprep.subr.mxu0 0.0
      %1014 = vmatpush1.msra.mxu0 0.0
      %1015 = vmatprep.subr.mxu0 0.0
      %1016 = vmatpush1.msra.mxu0 0.0
      %1017 = vmatprep.subr.mxu0 0.0
      %1018 = vmatpush1.msra.mxu0 0.0
      %1019 = vmatprep.mubr.f32.mxu0 0.0
      %1020 = vmatmul.mubr.f32.gmra.mrb[0].mxu0 %v528
      %v1021 = vpop.f32.mrb[0].mxu0
      %v1022 = vadd.f32 0.0, %v1021
      %v1023 = vpop.f32.mrb[0].mxu0
      %1024 = vmatprep.mubr.f32.mxu0 0.0
      %1025 = vmatmul.mubr.f32.gmra.mrb[0].mxu0 %v530
      %v1026 = vpop.f32.mrb[0].mxu0
      %v1027 = vadd.f32 0.0, %v1026
      %v1028 = vpop.f32.mrb[0].mxu0
      %1029 = vmatprep.mubr.f32.mxu0 0.0
      %1030 = vmatmul.mubr.f32.gmra.mrb[0].mxu0 %v532
      %v1031 = vpop.f32.mrb[0].mxu0
      %v1032 = vadd.f32 0.0, %v1031
      %v1033 = vpop.f32.mrb[0].mxu0
      %1034 = vmatprep.mubr.f32.mxu0 0.0
      %1035 = vmatmul.mubr.f32.gmra.mrb[0].mxu0 %v534
      %v1036 = vpop.f32.mrb[0].mxu0
      %v1037 = vadd.f32 0.0, %v1036
      %v1038 = vpop.f32.mrb[0].mxu0
      %1039 = vmatprep.mubr.f32.mxu0 0.0
      %1040 = vmatmul.mubr.f32.gmra.mrb[0].mxu0 %v536
      %v1041 = vpop.f32.mrb[0].mxu0
      %v1042 = vadd.f32 0.0, %v1041
      %v1043 = vpop.f32.mrb[0].mxu0
      %1044 = vmatprep.mubr.f32.mxu0 0.0
      %1045 = vmatmul.mubr.f32.gmra.mrb[0].mxu0 %v538
      %v1046 = vpop.f32.mrb[0].mxu0
      %v1047 = vadd.f32 0.0, %v1046
      %v1048 = vpop.f32.mrb[0].mxu0
      %1049 = vmatprep.mubr.f32.mxu0 0.0
      %1050 = vmatmul.mubr.f32.gmra.mrb[0].mxu0 %v540
      %v1051 = vpop.f32.mrb[0].mxu0
      %v1052 = vadd.f32 0.0, %v1051
      %v1053 = vpop.f32.mrb[0].mxu0
      %1054 = vmatprep.mubr.f32.mxu0 0.0
      %1055 = vmatmul.mubr.f32.gmra.mrb[0].mxu0 %v953
      %v1056 = vpop.f32.mrb[0].mxu0
      %v1057 = vadd.f32 0.0, %v1056
      %v1058 = vpop.f32.mrb[0].mxu0
      %1059 = vdwg.mxu0
      %v1060 = vadd.f32 %v944, %v1022
      %v1061 = vadd.f32 %v945, %v1027
      %v1062 = vadd.f32 %v946, %v1032
      %v1063 = vadd.f32 %v947, %v1037
      %v1064 = vadd.f32 %v948, %v1042
      %v1065 = vadd.f32 %v949, %v1047
      %v1066 = vadd.f32 %v950, %v1052
      %v1067 = vadd.f32 %v951, %v1057
      %v1069 = vrot.slane %v350, 1
      %v1070 = vrot.slane %v351, 1
      %v1071 = vsel %vm374, %v1069, %v1070
      %v1072 = vsel %vm399, %v1071, 0
      %v1075 = vsel %vm416, %v356, 0
      %1077 = vmatprep.subr.mxu0 0.0
      %1078 = vmatpush1.msra.mxu0 %v1075
      %1079 = vmatprep.subr.mxu0 0.0
      %1080 = vmatpush1.msra.mxu0 0.0
      %1081 = vmatprep.subr.mxu0 0.0
      %1082 = vmatpush1.msra.mxu0 0.0
      %1083 = vmatprep.subr.mxu0 0.0
      %1084 = vmatpush1.msra.mxu0 0.0
      %1085 = vmatprep.subr.mxu0 0.0
      %1086 = vmatpush1.msra.mxu0 0.0
      %1087 = vmatprep.subr.mxu0 0.0
      %1088 = vmatpush1.msra.mxu0 0.0
      %1089 = vmatprep.subr.mxu0 0.0
      %1090 = vmatpush1.msra.mxu0 0.0
      %1091 = vmatprep.subr.mxu0 0.0
      %1092 = vmatpush1.msra.mxu0 0.0
      %1093 = vmatprep.subr.mxu0 0.0
      %1094 = vmatpush1.msra.mxu0 0.0
      %1095 = vmatprep.subr.mxu0 0.0
      %1096 = vmatpush1.msra.mxu0 0.0
      %1097 = vmatprep.subr.mxu0 0.0
      %1098 = vmatpush1.msra.mxu0 0.0
      %1099 = vmatprep.subr.mxu0 0.0
      %1100 = vmatpush1.msra.mxu0 0.0
      %1101 = vmatprep.subr.mxu0 0.0
      %1102 = vmatpush1.msra.mxu0 0.0
      %1103 = vmatprep.subr.mxu0 0.0
      %1104 = vmatpush1.msra.mxu0 0.0
      %1105 = vmatprep.subr.mxu0 0.0
      %1106 = vmatpush1.msra.mxu0 0.0
      %1107 = vmatprep.subr.mxu0 0.0
      %1108 = vmatpush1.msra.mxu0 0.0
      %1109 = vmatprep.subr.mxu0 0.0
      %1110 = vmatpush1.msra.mxu0 0.0
      %1111 = vmatprep.subr.mxu0 0.0
      %1112 = vmatpush1.msra.mxu0 0.0
      %1113 = vmatprep.subr.mxu0 0.0
      %1114 = vmatpush1.msra.mxu0 0.0
      %1115 = vmatprep.subr.mxu0 0.0
      %1116 = vmatpush1.msra.mxu0 0.0
      %1117 = vmatprep.subr.mxu0 0.0
      %1118 = vmatpush1.msra.mxu0 0.0
      %1119 = vmatprep.subr.mxu0 0.0
      %1120 = vmatpush1.msra.mxu0 0.0
      %1121 = vmatprep.subr.mxu0 0.0
      %1122 = vmatpush1.msra.mxu0 0.0
      %1123 = vmatprep.subr.mxu0 0.0
      %1124 = vmatpush1.msra.mxu0 0.0
      %1125 = vmatprep.subr.mxu0 0.0
      %1126 = vmatpush1.msra.mxu0 0.0
      %1127 = vmatprep.subr.mxu0 0.0
      %1128 = vmatpush1.msra.mxu0 0.0
      %1129 = vmatprep.subr.mxu0 0.0
      %1130 = vmatpush1.msra.mxu0 0.0
      %1131 = vmatprep.subr.mxu0 0.0
      %1132 = vmatpush1.msra.mxu0 0.0
      %1133 = vmatprep.subr.mxu0 0.0
      %1134 = vmatpush1.msra.mxu0 0.0
      %1135 = vmatprep.subr.mxu0 0.0
      %1136 = vmatpush1.msra.mxu0 0.0
      %1137 = vmatprep.subr.mxu0 0.0
      %1138 = vmatpush1.msra.mxu0 0.0
      %1139 = vmatprep.subr.mxu0 0.0
      %1140 = vmatpush1.msra.mxu0 0.0
      %1141 = vmatprep.mubr.f32.mxu0 0.0
      %1142 = vmatmul.mubr.f32.gmra.mrb[0].mxu0 %v402
      %v1143 = vpop.f32.mrb[0].mxu0
      %v1144 = vadd.f32 0.0, %v1143
      %v1145 = vpop.f32.mrb[0].mxu0
      %1146 = vmatprep.mubr.f32.mxu0 0.0
      %1147 = vmatmul.mubr.f32.gmra.mrb[0].mxu0 %v404
      %v1148 = vpop.f32.mrb[0].mxu0
      %v1149 = vadd.f32 0.0, %v1148
      %v1150 = vpop.f32.mrb[0].mxu0
      %1151 = vmatprep.mubr.f32.mxu0 0.0
      %1152 = vmatmul.mubr.f32.gmra.mrb[0].mxu0 %v406
      %v1153 = vpop.f32.mrb[0].mxu0
      %v1154 = vadd.f32 0.0, %v1153
      %v1155 = vpop.f32.mrb[0].mxu0
      %1156 = vmatprep.mubr.f32.mxu0 0.0
      %1157 = vmatmul.mubr.f32.gmra.mrb[0].mxu0 %v408
      %v1158 = vpop.f32.mrb[0].mxu0
      %v1159 = vadd.f32 0.0, %v1158
      %v1160 = vpop.f32.mrb[0].mxu0
      %1161 = vmatprep.mubr.f32.mxu0 0.0
      %1162 = vmatmul.mubr.f32.gmra.mrb[0].mxu0 %v410
      %v1163 = vpop.f32.mrb[0].mxu0
      %v1164 = vadd.f32 0.0, %v1163
      %v1165 = vpop.f32.mrb[0].mxu0
      %1166 = vmatprep.mubr.f32.mxu0 0.0
      %1167 = vmatmul.mubr.f32.gmra.mrb[0].mxu0 %v412
      %v1168 = vpop.f32.mrb[0].mxu0
      %v1169 = vadd.f32 0.0, %v1168
      %v1170 = vpop.f32.mrb[0].mxu0
      %1171 = vmatprep.mubr.f32.mxu0 0.0
      %1172 = vmatmul.mubr.f32.gmra.mrb[0].mxu0 %v414
      %v1173 = vpop.f32.mrb[0].mxu0
      %v1174 = vadd.f32 0.0, %v1173
      %v1175 = vpop.f32.mrb[0].mxu0
      %1176 = vmatprep.mubr.f32.mxu0 0.0
      %1177 = vmatmul.mubr.f32.gmra.mrb[0].mxu0 %v1072
      %v1178 = vpop.f32.mrb[0].mxu0
      %v1179 = vadd.f32 0.0, %v1178
      %v1180 = vpop.f32.mrb[0].mxu0
      %1181 = vdwg.mxu0
      %v1182 = vadd.f32 %v1060, %v1144
      %v1183 = vadd.f32 %v1061, %v1149
      %v1184 = vadd.f32 %v1062, %v1154
      %v1185 = vadd.f32 %v1063, %v1159
      %v1186 = vadd.f32 %v1064, %v1164
      %v1187 = vadd.f32 %v1065, %v1169
      %v1188 = vadd.f32 %v1066, %v1174
      %v1189 = vadd.f32 %v1067, %v1179
      %v1191 = vlaneseq
      %v1192 = vshrl.u32 %v1191, 7
      %v1193 = vsub.s32 0, %v1192
      %v1194 = vrot.slane %v357, %v1193
      %v1196 = vadd.f32 %v1182, %v1194
      %v1197 = vadd.f32 %v1183, %v1194
      %v1198 = vadd.f32 %v1184, %v1194
      %v1199 = vadd.f32 %v1185, %v1194
      %v1200 = vadd.f32 %v1186, %v1194
      %v1201 = vadd.f32 %v1187, %v1194
      %v1202 = vadd.f32 %v1188, %v1194
      %v1203 = vadd.f32 %v1189, %v1194
      %1204 = vst.msk [vmem:[%s316] sm:$0xff] %vm399, %v1196
      %1205 = vst.msk [vmem:[%s316 + $0x8] sm:$0xff] %vm399, %v1197
      %1206 = vst.msk [vmem:[%s316 + $0x10] sm:$0xff] %vm399, %v1198
      %1207 = vst.msk [vmem:[%s316 + $0x18] sm:$0xff] %vm399, %v1199
      %1208 = vst.msk [vmem:[%s316 + $0x20] sm:$0xff] %vm399, %v1200
      %1209 = vst.msk [vmem:[%s316 + $0x28] sm:$0xff] %vm399, %v1201
      %1210 = vst.msk [vmem:[%s316 + $0x30] sm:$0xff] %vm399, %v1202
      %1211 = vst.msk [vmem:[%s316 + $0x38] sm:$0xff] %vm399, %v1203
      %s1212 = smul.u32 8, %s20
      %p1213 = scmp.lt.s32.totalorder %s19, 1
      %s1214 = scalar_select %p1213, %s19, 1
      %p1215 = scmp.lt.s32.totalorder %s1212, 7
      %s1216 = scalar_select %p1215, %s1212, 7
      %s1217 = smul.addr %s1214, 8
      %s1218 = sadd.s32 %s1216, %s1217
      %s1219 = smul.addr %s1218, 8
      %s1220 = scalar_lea.vmem %s4, %s1219
      // Predicated region
      $region37: #{downsample.1} parent=35 // pred_check
        %p1221 = pneg %p149
      $region38: #{downsample.1} parent=35 // pred_check_branch
        %1223 = sbr.rel (%p1221) target = $region40
      $region39: #{downsample.1} parent=35 // pred_region
        %s1224 = smul.u32 8, %s20
      $region40: #{downsample.1} parent=35 // pred_fallthru
        _
    $region36: #{downsample.1} parent=5 // pred_fallthru
      _
    %p1225 = scmp.le.s32.totalorder 2, %s10
    // Predicated region
    $region41: #{downsample.1} parent=5 // pred_check
      %p1226 = pneg %p1225
    $region42: #{downsample.1} parent=5 // pred_check_branch
      %1228 = sbr.rel (%p1226) target = $region44
    $region43: #{downsample.1} parent=5 // pred_region
      %s1229 = ssub.s32 %s10, 2
      // Predicated region
      $region45: #{downsample.1} parent=43 // pred_check
        %p1230 = pneg %p155
      $region46: #{downsample.1} parent=43 // pred_check_branch
        %1232 = sbr.rel (%p1230) target = $region48
      $region47: #{downsample.1} parent=43 // pred_region
        %s1233 = smul.u32 8, %s22
        %p1234 = scmp.lt.s32.totalorder %s21, 1
        %s1235 = scalar_select %p1234, %s21, 1
        %p1236 = scmp.lt.s32.totalorder %s1233, 7
        %s1237 = scalar_select %p1236, %s1233, 7
        %s1238 = smul.addr %s1235, 8
        %s1239 = sadd.s32 %s1237, %s1238
        %s1240 = smul.addr %s1239, 8
        %s1241 = scalar_lea.vmem %s4, %s1240
      $region48: #{downsample.1} parent=43 // pred_fallthru
        _
    $region44: #{downsample.1} parent=5 // pred_fallthru
      _
  $region6: #{downsample.1} parent=0 // loop_footer
    %s14 = sadd.s32 1, %s10
  $region7: #{downsample.1} parent=0 // loop_footer_branch
    %9 = sbr.rel target = $region3
  $region8: #{downsample.1} parent=0 // loop_exit
    _

</llo_original>
